<compile_context>
chip_gen: v7x
topology: tpu7x:2x2x1
jax: 0.10.0
libtpu: 0.0.40
codegen_flags: <defaults>
</compile_context>

<pallas_src>
import functools

import jax
import jax.numpy as jnp
from jax.experimental import pallas as pl
from jax.experimental.pallas import tpu as pltpu

LANE = 128     # lane (last-dim) granularity
SUBLANE = 16   # sublane granularity for bf16 tiles (also satisfies f32's 8)


def _round_up(n, m):
    return ((n + m - 1) // m) * m


@functools.lru_cache(maxsize=1)
def _vmem_config():
    """(budget_bytes, vmem_limit_bytes, two_tensorcores) for the local TPU generation."""
    two_tc = False
    vmem_cap = 64 << 20            # conservative default (v7x per-TC VMEM)
    try:
        kind = jax.devices()[0].device_kind.lower()
        two_tc = "7" in kind       # v7x: 2 TensorCores/chip; v5e/v6e: 1
        if not two_tc:
            vmem_cap = 128 << 20   # v5e / v6e physical VMEM
    except Exception:
        pass
    try:
        vmem_cap = int(pltpu.get_tpu_info().vmem_capacity_bytes)
    except Exception:
        pass
    budget = int(vmem_cap * 0.60)  # weights (x1 buffer) + tiles must fit here
    limit = int(vmem_cap * 0.75)   # scoped-VMEM limit requested from Mosaic
    return budget, limit, two_tc


def _tile_bytes(tb, d_in_p, h_p, d_out_p, out_elem_bytes):
    """Per-grid-step VMEM footprint for a batch tile of tb rows."""
    return (2 * tb * d_in_p * 4                    # double-buffered f32 x tile
            + 2 * tb * d_out_p * out_elem_bytes    # double-buffered out tile
            + tb * d_in_p * 2                      # bf16 cast of x
            + tb * h_p * (4 + 2)                   # f32 h + bf16 h
            + tb * d_out_p * 4)                    # f32 pre-sigmoid y


def _pick_tb(batch, d_in_p, h_p, d_out_p, weight_bytes, budget, two_tc, out_elem_bytes):
    """Largest batch tile that fits the VMEM budget; the budget (not the list) is the ceiling."""
    batch_ru = _round_up(batch, SUBLANE)
    tb = SUBLANE
    for cand in (2048, 1024, 512, 256, 128, 64, 32, 16):
        if cand > batch_ru:
            continue
        if weight_bytes + _tile_bytes(cand, d_in_p, h_p, d_out_p, out_elem_bytes) <= budget:
            tb = cand
            break
    # Megacore split only where it exists (v7x, 2 TCs). On 1-TC v5e/v6e the grid is a
    # sequential loop, so shrinking tb just to manufacture >=2 steps is pure overhead.
    if two_tc:
        while tb > SUBLANE and _round_up(batch, tb) // tb < 2:
            tb //= 2
    return tb


def mlp_kernel(x_ref, w1_ref, b1_ref, w2_ref, b2_ref, out_ref):
    # x arrives in f32 (no wrapper-side cast pass over HBM); cast to bf16 on the
    # VPU right before the MXU. Accumulate in f32; bias adds + sigmoids stay in
    # f32 (VPU add + EUP transcendental).
    x = x_ref[...].astype(jnp.bfloat16)
    h = jnp.dot(x, w1_ref[...], preferred_element_type=jnp.float32)
    h = jax.nn.sigmoid(h + b1_ref[...])                        # (tb, H_p) f32
    y = jnp.dot(h.astype(jnp.bfloat16), w2_ref[...],
                preferred_element_type=jnp.float32)
    out_ref[...] = jax.nn.sigmoid(y + b2_ref[...]).astype(out_ref.dtype)


def net_forward(x, w1, b1, w2, b2, out_dtype=jnp.float32):
    """x: (B, D_in) f32. Weights pre-transposed vs torch.nn.Linear:
    w1: (D_in, H), b1: (H,) or (1, H), w2: (H, D_out), b2: (D_out,) or (1, D_out)."""
    B, D_in = x.shape
    H = w1.shape[1]
    D_out = w2.shape[1]
    b1 = b1.reshape(1, H)
    b2 = b2.reshape(1, D_out)

    # Lane-align feature dims; tile-align the batch.
    D_in_p = _round_up(D_in, LANE)
    H_p = _round_up(H, LANE)
    D_out_p = _round_up(D_out, LANE)

    budget, vmem_limit, two_tc = _vmem_config()
    out_elem_bytes = jnp.dtype(out_dtype).itemsize
    # Single-buffered resident weights (matches pl.Buffered(1) specs below).
    weight_bytes = 2 * (D_in_p * H_p + H_p * D_out_p) + 4 * (H_p + D_out_p)

    # Graceful fallback when resident weights can't fit the VMEM budget.
    if weight_bytes + _tile_bytes(SUBLANE, D_in_p, H_p, D_out_p, out_elem_bytes) > budget:
        # TODO(synk): K/N-tiled resident-weight Pallas path with an f32 accumulator
        # for multi-MiB layers instead of falling back to plain XLA.
        h = jax.nn.sigmoid(x @ w1 + b1)
        return jax.nn.sigmoid(h @ w2 + b2).astype(out_dtype)

    tb = _pick_tb(B, D_in_p, H_p, D_out_p, weight_bytes, budget, two_tc, out_elem_bytes)
    B_p = _round_up(B, tb)

    # x stays in its original f32 dtype; pad only when the shape actually needs it
    # (the bf16 cast happens inside the kernel, hidden under the MXU slot).
    if (B_p, D_in_p) == (B, D_in):
        xp = x
    else:
        xp = jnp.pad(x, ((0, B_p - B), (0, D_in_p - D_in)))
    w1p = jnp.pad(w1, ((0, D_in_p - D_in), (0, H_p - H))).astype(jnp.bfloat16)
    w2p = jnp.pad(w2, ((0, H_p - H), (0, D_out_p - D_out))).astype(jnp.bfloat16)
    b1p = jnp.pad(b1, ((0, 0), (0, H_p - H))).astype(jnp.float32)
    b2p = jnp.pad(b2, ((0, 0), (0, D_out_p - D_out))).astype(jnp.float32)

    resident = pl.Buffered(1)   # grid-invariant operands: one VMEM buffer, DMA'd once
    out = pl.pallas_call(
        mlp_kernel,
        out_shape=jax.ShapeDtypeStruct((B_p, D_out_p), out_dtype),
        grid_spec=pltpu.PrefetchScalarGridSpec(
            num_scalar_prefetch=0,
            grid=(B_p // tb,),
            in_specs=[
                pl.BlockSpec((tb, D_in_p), lambda i: (i, 0)),                       # x (streamed)
                pl.BlockSpec((D_in_p, H_p), lambda i: (0, 0), pipeline_mode=resident),   # W1
                pl.BlockSpec((1, H_p), lambda i: (0, 0), pipeline_mode=resident),        # b1
                pl.BlockSpec((H_p, D_out_p), lambda i: (0, 0), pipeline_mode=resident),  # W2
                pl.BlockSpec((1, D_out_p), lambda i: (0, 0), pipeline_mode=resident),    # b2
            ],
            out_specs=pl.BlockSpec((tb, D_out_p), lambda i: (i, 0)),
        ),
        compiler_params=pltpu.CompilerParams(
            dimension_semantics=("parallel",),
            vmem_limit_bytes=vmem_limit,
        ),
    )(xp, w1p, b1p, w2p, b2p)

    return out[:B, :D_out]


def init_params(key, input_size, hidden, output_size):
    # PyTorch-style init: U(-1/sqrt(fan_in), 1/sqrt(fan_in)); weights stored
    # transposed relative to torch, i.e. (in_features, out_features).
    k1, k2, k3, k4 = jax.random.split(key, 4)
    bound1 = 1.0 / (input_size ** 0.5)
    bound2 = 1.0 / (hidden ** 0.5)
    w1 = jax.random.uniform(k1, (input_size, hidden), jnp.float32, -bound1, bound1)
    b1 = jax.random.uniform(k2, (1, hidden), jnp.float32, -bound1, bound1)
    w2 = jax.random.uniform(k3, (hidden, output_size), jnp.float32, -bound2, bound2)
    b2 = jax.random.uniform(k4, (1, output_size), jnp.float32, -bound2, bound2)
    return w1, b1, w2, b2


def _reference(x, w1, b1, w2, b2):
    return jax.nn.sigmoid(jax.nn.sigmoid(x @ w1 + b1) @ w2 + b2)


if __name__ == "__main__":
    key = jax.random.PRNGKey(0)

    # Canonical small shape: Net(input_size=16, hidden=32, output_size=8), batch=8.
    # Single padded tile -> one grid step, one MXU pass per matmul.
    kx, kp, key = jax.random.split(key, 3)
    x = jax.random.normal(kx, (8, 16), dtype=jnp.float32)
    w1, b1, w2, b2 = init_params(kp, 16, 32, 8)
    out = jax.block_until_ready(net_forward(x, w1, b1, w2, b2))
    ref = _reference(x, w1, b1, w2, b2)
    assert out.shape == (8, 8)
    # bf16 MXU inputs -> loosened tolerance vs f32 reference.
    assert jnp.allclose(out, ref, atol=2e-2, rtol=0), float(jnp.max(jnp.abs(out - ref)))

    # Ragged, non-aligned shape to exercise the padding/slicing path.
    kx2, kp2, key = jax.random.split(key, 3)
    x2 = jax.random.normal(kx2, (10, 20), dtype=jnp.float32)
    p2 = init_params(kp2, 20, 50, 3)
    o2 = jax.block_until_ready(net_forward(x2, *p2))
    r2 = _reference(x2, *p2)
    assert o2.shape == (10, 3)
    assert jnp.allclose(o2, r2, atol=2e-2, rtol=0), float(jnp.max(jnp.abs(o2 - r2)))

    # Larger batch: multi-step grid, streamed x tiles, batch padding.
    kx3, kp3 = jax.random.split(key)
    x3 = jax.random.normal(kx3, (300, 16), dtype=jnp.float32)
    p3 = init_params(kp3, 16, 32, 8)
    o3 = jax.block_until_ready(net_forward(x3, *p3))
    r3 = _reference(x3, *p3)
    assert o3.shape == (300, 8)
    assert jnp.allclose(o3, r3, atol=2e-2, rtol=0), float(jnp.max(jnp.abs(o3 - r3)))

    print("KERNEL_OK")
</pallas_src>

<mosaic_0001>
module attributes {stable_mosaic.version = 11 : i64} {
  func.func @mlp_kernel(%arg0: i32, %arg1: memref<16x128xf32, #tpu.memory_space<vmem>>, %arg2: memref<128x128xbf16, #tpu.memory_space<vmem>>, %arg3: memref<1x128xf32, #tpu.memory_space<vmem>>, %arg4: memref<128x128xbf16, #tpu.memory_space<vmem>>, %arg5: memref<1x128xf32, #tpu.memory_space<vmem>>, %arg6: memref<16x128xf32, #tpu.memory_space<vmem>>) attributes {dimension_semantics = [#tpu.dimension_semantics<parallel>], iteration_bounds = array<i64: 1>, scalar_prefetch = 0 : i64, scratch_operands = 0 : i64, tpu.core_type = #tpu.core_type<tc>, window_params = [{transform_indices = @transform_0, window_bounds = array<i64: 16, 128>}, {pipeline_mode = #tpu.pipeline_mode<synchronous>, transform_indices = @transform_1, window_bounds = array<i64: 128, 128>}, {pipeline_mode = #tpu.pipeline_mode<synchronous>, transform_indices = @transform_2, window_bounds = array<i64: 1, 128>}, {pipeline_mode = #tpu.pipeline_mode<synchronous>, transform_indices = @transform_3, window_bounds = array<i64: 128, 128>}, {pipeline_mode = #tpu.pipeline_mode<synchronous>, transform_indices = @transform_4, window_bounds = array<i64: 1, 128>}, {transform_indices = @transform_5, window_bounds = array<i64: 16, 128>}]} {
    %c0 = arith.constant 0 : index
    %c0_0 = arith.constant 0 : index
    %0 = vector.load %arg1[%c0, %c0_0] : memref<16x128xf32, #tpu.memory_space<vmem>>, vector<16x128xf32>
    %1 = arith.truncf %0 : vector<16x128xf32> to vector<16x128xbf16>
    %c0_1 = arith.constant 0 : index
    %c0_2 = arith.constant 0 : index
    %2 = vector.load %arg2[%c0_1, %c0_2] : memref<128x128xbf16, #tpu.memory_space<vmem>>, vector<128x128xbf16>
    %cst = arith.constant dense<0.000000e+00> : vector<16x128xf32>
    %3 = tpu.matmul %1, %2, %cst {dimension_numbers = #tpu.dot_dimension_numbers<[1], [0], [0], [1], [0, 0, 1, 1], [], []>} : vector<16x128xbf16>, vector<128x128xbf16>, vector<16x128xf32> -> vector<16x128xf32>
    %c0_3 = arith.constant 0 : index
    %c0_4 = arith.constant 0 : index
    %4 = vector.load %arg3[%c0_3, %c0_4] : memref<1x128xf32, #tpu.memory_space<vmem>>, vector<1x128xf32>
    %5 = vector.broadcast %4 : vector<1x128xf32> to vector<16x128xf32>
    %6 = arith.addf %3, %5 : vector<16x128xf32>
    %7 = arith.negf %6 : vector<16x128xf32>
    %8 = math.exp %7 : vector<16x128xf32>
    %cst_5 = arith.constant 1.000000e+00 : f32
    %9 = vector.broadcast %cst_5 : f32 to vector<16x128xf32>
    %10 = arith.addf %9, %8 : vector<16x128xf32>
    %11 = arith.divf %9, %10 : vector<16x128xf32>
    %12 = arith.truncf %11 : vector<16x128xf32> to vector<16x128xbf16>
    %c0_6 = arith.constant 0 : index
    %c0_7 = arith.constant 0 : index
    %13 = vector.load %arg4[%c0_6, %c0_7] : memref<128x128xbf16, #tpu.memory_space<vmem>>, vector<128x128xbf16>
    %cst_8 = arith.constant dense<0.000000e+00> : vector<16x128xf32>
    %14 = tpu.matmul %12, %13, %cst_8 {dimension_numbers = #tpu.dot_dimension_numbers<[1], [0], [0], [1], [0, 0, 1, 1], [], []>} : vector<16x128xbf16>, vector<128x128xbf16>, vector<16x128xf32> -> vector<16x128xf32>
    %c0_9 = arith.constant 0 : index
    %c0_10 = arith.constant 0 : index
    %15 = vector.load %arg5[%c0_9, %c0_10] : memref<1x128xf32, #tpu.memory_space<vmem>>, vector<1x128xf32>
    %16 = vector.broadcast %15 : vector<1x128xf32> to vector<16x128xf32>
    %17 = arith.addf %14, %16 : vector<16x128xf32>
    %18 = arith.negf %17 : vector<16x128xf32>
    %19 = math.exp %18 : vector<16x128xf32>
    %cst_11 = arith.constant 1.000000e+00 : f32
    %20 = vector.broadcast %cst_11 : f32 to vector<16x128xf32>
    %21 = arith.addf %20, %19 : vector<16x128xf32>
    %22 = arith.divf %20, %21 : vector<16x128xf32>
    %c0_12 = arith.constant 0 : index
    %c0_13 = arith.constant 0 : index
    %23 = vector.load %arg6[%c0_12, %c0_13] : memref<16x128xf32, #tpu.memory_space<vmem>>, vector<16x128xf32>
    tpu.vector_store %arg6[%c0_12, %c0_13], %22 {strides = array<i32>} : memref<16x128xf32, #tpu.memory_space<vmem>>, vector<16x128xf32>,
    return
  }
  func.func @transform_0(%arg0: i32) -> (i32, i32) {
    %c0_i32 = arith.constant 0 : i32
    %c0_i32_0 = arith.constant 0 : i32
    return %arg0, %c0_i32 : i32, i32
  }
  func.func @transform_1(%arg0: i32) -> (i32, i32) {
    %c0_i32 = arith.constant 0 : i32
    %c0_i32_0 = arith.constant 0 : i32
    %c0_i32_1 = arith.constant 0 : i32
    return %c0_i32, %c0_i32_0 : i32, i32
  }
  func.func @transform_2(%arg0: i32) -> (i32, i32) {
    %c0_i32 = arith.constant 0 : i32
    %c0_i32_0 = arith.constant 0 : i32
    %c0_i32_1 = arith.constant 0 : i32
    return %c0_i32, %c0_i32_0 : i32, i32
  }
  func.func @transform_3(%arg0: i32) -> (i32, i32) {
    %c0_i32 = arith.constant 0 : i32
    %c0_i32_0 = arith.constant 0 : i32
    %c0_i32_1 = arith.constant 0 : i32
    return %c0_i32, %c0_i32_0 : i32, i32
  }
  func.func @transform_4(%arg0: i32) -> (i32, i32) {
    %c0_i32 = arith.constant 0 : i32
    %c0_i32_0 = arith.constant 0 : i32
    %c0_i32_1 = arith.constant 0 : i32
    return %c0_i32, %c0_i32_0 : i32, i32
  }
  func.func @transform_5(%arg0: i32) -> (i32, i32) {
    %c0_i32 = arith.constant 0 : i32
    %c0_i32_0 = arith.constant 0 : i32
    return %arg0, %c0_i32 : i32, i32
  }
}

</mosaic_0001>

<llo_original>
// kernel: tpu_custom_call.1
$region0: #{tpu_custom_call.1}
  #allocation0 [shape = 'u32[]', space=smem, size = 0x4, offset = 0x4, fixed_abs, tag = 'smem constant byte address 0x4 - core index']
  #allocation1 [shape = 'u32[144,128]{1,0:T(1,128)}', space=vmem, size = 0x12000, scoped, tag = 'internal scratch']
  %s0 = inlined_call_operand.hbm [shape: f32[16,128], index: 0, kind: input, shape index: {}]
  %s1 = inlined_call_operand.hbm [shape: bf16[128,128], index: 1, kind: input, shape index: {}]
  %s2 = inlined_call_operand.hbm [shape: f32[1,128], index: 2, kind: input, shape index: {}]
  %s3 = inlined_call_operand.hbm [shape: bf16[128,128], index: 3, kind: input, shape index: {}]
  %s4 = inlined_call_operand.hbm [shape: f32[1,128], index: 4, kind: input, shape index: {}]
  %s5 = inlined_call_operand.hbm [shape: f32[16,128], index: 5, kind: output, shape index: {}]
  %s6 = sld [smem:[#allocation0]]
  $region50: #{tpu_custom_call.1} parent=0
    _
  %s8 = ssub.s32 1, %s6
  %s9 = scalar_select 0, %s8, %s6
  $region1: #{tpu_custom_call.1} parent=0
    #allocation2 [shape = 'u8[8192]{0}', space=vmem, size = 0x2000, scoped, tag = 'input window, operand 0, single buffered']
    #allocation3 [shape = 's32[1]{0}', space=sflag, size = 0x4, scoped, tag = 'scoped memory for tpu_custom_call.1']
    #allocation4 [shape = 's32[1]{0}', space=sflag, size = 0x4, scoped, tag = 'scoped memory for tpu_custom_call.1']
    #allocation5 [shape = 'u8[32768]{0}', space=vmem, size = 0x8000, scoped, tag = 'input window, operand 1, single buffered']
    #allocation6 [shape = 's32[1]{0}', space=sflag, size = 0x4, scoped, tag = 'scoped memory for tpu_custom_call.1']
    #allocation7 [shape = 'u8[512]{0}', space=vmem, size = 0x400, scoped, tag = 'input window, operand 2, single buffered']
    #allocation8 [shape = 'u8[32768]{0}', space=vmem, size = 0x8000, scoped, tag = 'input window, operand 3, single buffered']
    #allocation9 [shape = 's32[1]{0}', space=sflag, size = 0x4, scoped, tag = 'scoped memory for tpu_custom_call.1']
    #allocation10 [shape = 'u8[512]{0}', space=vmem, size = 0x400, scoped, tag = 'input window, operand 4, single buffered']
    #allocation11 [shape = 'u8[8192]{0}', space=vmem, size = 0x2000, scoped, tag = 'output window, operand 0, single buffered']
    %10 = vsyncpa [#allocation3], 0
    %11 = vsyncpa [#allocation6], 0
    %12 = vsyncpa [#allocation9], 0
    %13 = vsyncpa [#allocation4], 0
    // Predicated region
    $region2: #{tpu_custom_call.1} parent=1 // pred_check
      _
    $region3: #{tpu_custom_call.1} parent=1 // pred_check_branch
      %15 = sbr.rel (0) target = $region5
    $region4: #{tpu_custom_call.1} parent=1 // pred_region
      %s17 = ssub.s32 256, 256
      %18 = vsyncadd [#allocation3], %s17
      %s19 = sshll.u32 [#allocation2], 4
      %s20 = int_to_ptr.vmem [resolvable:$true] %s19
      %25 = dma.hbm_to_vmem [thread:$0]  %s0, 256, %s20, [#allocation3], 128, 128, 8
    $region5: #{tpu_custom_call.1} parent=1 // pred_fallthru
      _
    // Predicated region
    $region6: #{tpu_custom_call.1} parent=1 // pred_check
      _
    $region7: #{tpu_custom_call.1} parent=1 // pred_check_branch
      %27 = sbr.rel (0) target = $region9
    $region8: #{tpu_custom_call.1} parent=1 // pred_region
      %s29 = ssub.s32 1024, 1024
      %30 = vsyncadd [#allocation6], %s29
      %s31 = sshll.u32 [#allocation5], 4
      %s32 = int_to_ptr.vmem [resolvable:$true] %s31
      %37 = dma.hbm_to_vmem [thread:$0]  %s1, 1024, %s32, [#allocation6], 64, 64, 4
    $region9: #{tpu_custom_call.1} parent=1 // pred_fallthru
      _
    // Predicated region
    $region10: #{tpu_custom_call.1} parent=1 // pred_check
      _
    $region11: #{tpu_custom_call.1} parent=1 // pred_check_branch
      %39 = sbr.rel (0) target = $region13
    $region12: #{tpu_custom_call.1} parent=1 // pred_region
      %s41 = ssub.s32 16, 16
      %42 = vsyncadd [#allocation6], %s41
      %s44 = sshll.u32 [#allocation7], 4
      %s45 = int_to_ptr.vmem [resolvable:$true] %s44
      %47 = dma.hbm_to_vmem [thread:$0]  %s2, 16, %s45, [#allocation6]
    $region13: #{tpu_custom_call.1} parent=1 // pred_fallthru
      _
    // Predicated region
    $region14: #{tpu_custom_call.1} parent=1 // pred_check
      _
    $region15: #{tpu_custom_call.1} parent=1 // pred_check_branch
      %49 = sbr.rel (0) target = $region17
    $region16: #{tpu_custom_call.1} parent=1 // pred_region
      %s51 = ssub.s32 1024, 1024
      %52 = vsyncadd [#allocation9], %s51
      %s53 = sshll.u32 [#allocation8], 4
      %s54 = int_to_ptr.vmem [resolvable:$true] %s53
      %59 = dma.hbm_to_vmem [thread:$0]  %s3, 1024, %s54, [#allocation9], 64, 64, 4
    $region17: #{tpu_custom_call.1} parent=1 // pred_fallthru
      _
    // Predicated region
    $region18: #{tpu_custom_call.1} parent=1 // pred_check
      _
    $region19: #{tpu_custom_call.1} parent=1 // pred_check_branch
      %61 = sbr.rel (0) target = $region21
    $region20: #{tpu_custom_call.1} parent=1 // pred_region
      %s63 = ssub.s32 16, 16
      %64 = vsyncadd [#allocation9], %s63
      %s66 = sshll.u32 [#allocation10], 4
      %s67 = int_to_ptr.vmem [resolvable:$true] %s66
      %69 = dma.hbm_to_vmem [thread:$0]  %s4, 16, %s67, [#allocation9]
    $region21: #{tpu_custom_call.1} parent=1 // pred_fallthru
      _
    // Predicated region
    $region22: #{tpu_custom_call.1} parent=1 // pred_check
      _
    $region23: #{tpu_custom_call.1} parent=1 // pred_check_branch
      %71 = sbr.rel (0) target = $region25
    $region24: #{tpu_custom_call.1} parent=1 // pred_region
      %72 = dma.done [#allocation3], 256
    $region25: #{tpu_custom_call.1} parent=1 // pred_fallthru
      _
    // Predicated region
    $region26: #{tpu_custom_call.1} parent=1 // pred_check
      _
    $region27: #{tpu_custom_call.1} parent=1 // pred_check_branch
      %74 = sbr.rel (0) target = $region29
    $region28: #{tpu_custom_call.1} parent=1 // pred_region
      %75 = dma.done [#allocation6], 1024
    $region29: #{tpu_custom_call.1} parent=1 // pred_fallthru
      _
    // Predicated region
    $region30: #{tpu_custom_call.1} parent=1 // pred_check
      _
    $region31: #{tpu_custom_call.1} parent=1 // pred_check_branch
      %77 = sbr.rel (0) target = $region33
    $region32: #{tpu_custom_call.1} parent=1 // pred_region
      %78 = dma.done [#allocation6], 16
    $region33: #{tpu_custom_call.1} parent=1 // pred_fallthru
      _
    // Predicated region
    $region34: #{tpu_custom_call.1} parent=1 // pred_check
      _
    $region35: #{tpu_custom_call.1} parent=1 // pred_check_branch
      %80 = sbr.rel (0) target = $region37
    $region36: #{tpu_custom_call.1} parent=1 // pred_region
      %81 = dma.done [#allocation9], 1024
    $region37: #{tpu_custom_call.1} parent=1 // pred_fallthru
      _
    // Predicated region
    $region38: #{tpu_custom_call.1} parent=1 // pred_check
      _
    $region39: #{tpu_custom_call.1} parent=1 // pred_check_branch
      %83 = sbr.rel (0) target = $region41
    $region40: #{tpu_custom_call.1} parent=1 // pred_region
      %84 = dma.done [#allocation9], 16
    $region41: #{tpu_custom_call.1} parent=1 // pred_fallthru
      _
    %v86 = vld [vmem:[#allocation2] sm:$0xff]
    %v87 = vld [vmem:[#allocation2 + $0x8] sm:$0xff]
    %v88 = vpack.c.bf16 %v87, %v86
    %v89 = vld [vmem:[#allocation5] sm:$0xf]
    %v90 = vld [vmem:[#allocation5 + $0x4] sm:$0xf]
    %v91 = vld [vmem:[#allocation5 + $0x8] sm:$0xf]
    %v92 = vld [vmem:[#allocation5 + $0xc] sm:$0xf]
    %v93 = vld [vmem:[#allocation5 + $0x10] sm:$0xf]
    %v94 = vld [vmem:[#allocation5 + $0x14] sm:$0xf]
    %v95 = vld [vmem:[#allocation5 + $0x18] sm:$0xf]
    %v96 = vld [vmem:[#allocation5 + $0x1c] sm:$0xf]
    %v97 = vld [vmem:[#allocation5 + $0x20] sm:$0xf]
    %v98 = vld [vmem:[#allocation5 + $0x24] sm:$0xf]
    %v99 = vld [vmem:[#allocation5 + $0x28] sm:$0xf]
    %v100 = vld [vmem:[#allocation5 + $0x2c] sm:$0xf]
    %v101 = vld [vmem:[#allocation5 + $0x30] sm:$0xf]
    %v102 = vld [vmem:[#allocation5 + $0x34] sm:$0xf]
    %v103 = vld [vmem:[#allocation5 + $0x38] sm:$0xf]
    %v104 = vld [vmem:[#allocation5 + $0x3c] sm:$0xf]
    %v105 = vld [vmem:[#allocation7] sm:$0x1]
    %v107 = vlaneseq
    %v108 = vshrl.u32 %v107, 7
    %v109 = vsub.s32 0, %v108
    %v110 = vrot.slane %v105, %v109
    %v128 = vunpack.c.l.b16 %v89
    %v129 = vunpack.c.l.b16 %v90
    %v130 = vunpack.c.l.b16 %v91
    %v131 = vunpack.c.l.b16 %v92
    %v132 = vunpack.c.l.b16 %v93
    %v133 = vunpack.c.l.b16 %v94
    %v134 = vunpack.c.l.b16 %v95
    %v135 = vunpack.c.l.b16 %v96
    %v136 = vunpack.c.l.b16 %v97
    %v137 = vunpack.c.l.b16 %v98
    %v138 = vunpack.c.l.b16 %v99
    %v139 = vunpack.c.l.b16 %v100
    %v140 = vunpack.c.l.b16 %v101
    %v141 = vunpack.c.l.b16 %v102
    %v142 = vunpack.c.l.b16 %v103
    %v143 = vunpack.c.l.b16 %v104
    %v144 = vpack.c.b16 %v129, %v128
    %v145 = vpack.c.b16 %v131, %v130
    %v146 = vpack.c.b16 %v133, %v132
    %v147 = vpack.c.b16 %v135, %v134
    %v148 = vpack.c.b16 %v137, %v136
    %v149 = vpack.c.b16 %v139, %v138
    %v150 = vpack.c.b16 %v141, %v140
    %v151 = vpack.c.b16 %v143, %v142
    %160 = vmatprep.subr.bf16.mxu0 0
    %161 = vmatpush1.bf16.msra.mxu0 %v144
    %162 = vmatprep.subr.bf16.mxu0 0
    %163 = vmatpush1.bf16.msra.mxu0 %v145
    %164 = vmatprep.subr.bf16.mxu0 0
    %165 = vmatpush1.bf16.msra.mxu0 %v146
    %166 = vmatprep.subr.bf16.mxu0 0
    %167 = vmatpush1.bf16.msra.mxu0 %v147
    %168 = vmatprep.subr.bf16.mxu0 0
    %169 = vmatpush1.bf16.msra.mxu0 %v148
    %170 = vmatprep.subr.bf16.mxu0 0
    %171 = vmatpush1.bf16.msra.mxu0 %v149
    %172 = vmatprep.subr.bf16.mxu0 0
    %173 = vmatpush1.bf16.msra.mxu0 %v150
    %174 = vmatprep.subr.bf16.mxu0 0
    %175 = vmatpush1.bf16.msra.mxu0 %v151
    %176 = vmatprep.subr.bf16.mxu0 0
    %177 = vmatpush1.bf16.msra.mxu0 0
    %178 = vmatprep.subr.bf16.mxu0 0
    %179 = vmatpush1.bf16.msra.mxu0 0
    %180 = vmatprep.subr.bf16.mxu0 0
    %181 = vmatpush1.bf16.msra.mxu0 0
    %182 = vmatprep.subr.bf16.mxu0 0
    %183 = vmatpush1.bf16.msra.mxu0 0
    %184 = vmatprep.subr.bf16.mxu0 0
    %185 = vmatpush1.bf16.msra.mxu0 0
    %186 = vmatprep.subr.bf16.mxu0 0
    %187 = vmatpush1.bf16.msra.mxu0 0
    %188 = vmatprep.subr.bf16.mxu0 0
    %189 = vmatpush1.bf16.msra.mxu0 0
    %190 = vmatprep.subr.bf16.mxu0 0
    %191 = vmatpush1.bf16.msra.mxu0 0
    %192 = vmatprep.mubr.bf16.mxu0 0
    %193 = vmatmul.mubr.bf16.gmra.mrb[0].mxu0 %v88
    %v194 = vpop.f32.mrb[0].mxu0
    %v195 = vadd.f32 %v110, %v194
    %v196 = vpop.f32.mrb[0].mxu0
    %v197 = vpop.f32.mrb[0].mxu0
    %v198 = vadd.f32 %v110, %v197
    %v199 = vpop.f32.mrb[0].mxu0
    %200 = vdwg.mxu0
    %v201 = vxor.u32 %v195, 2147483648
    %v202 = vxor.u32 %v198, 2147483648
    %v203 = vmul.f32 %v201, 1.442695
    %v204 = vpow.pop %v203
    %v205 = vmul.f32 %v202, 1.442695
    %v206 = vpow.pop %v205
    %v207 = vadd.f32 %v204, 1.0
    %v208 = vadd.f32 %v206, 1.0
    %v209 = vrcp.pop %v207
    %v210 = vmul.f32 1.0, %v209
    %v211 = vrcp.pop %v208
    %v212 = vmul.f32 1.0, %v211
    %v213 = vpack.c.bf16 %v212, %v210
    %v214 = vld [vmem:[#allocation8] sm:$0xf]
    %v215 = vld [vmem:[#allocation8 + $0x4] sm:$0xf]
    %v216 = vld [vmem:[#allocation8 + $0x8] sm:$0xf]
    %v217 = vld [vmem:[#allocation8 + $0xc] sm:$0xf]
    %v218 = vld [vmem:[#allocation8 + $0x10] sm:$0xf]
    %v219 = vld [vmem:[#allocation8 + $0x14] sm:$0xf]
    %v220 = vld [vmem:[#allocation8 + $0x18] sm:$0xf]
    %v221 = vld [vmem:[#allocation8 + $0x1c] sm:$0xf]
    %v222 = vld [vmem:[#allocation8 + $0x20] sm:$0xf]
    %v223 = vld [vmem:[#allocation8 + $0x24] sm:$0xf]
    %v224 = vld [vmem:[#allocation8 + $0x28] sm:$0xf]
    %v225 = vld [vmem:[#allocation8 + $0x2c] sm:$0xf]
    %v226 = vld [vmem:[#allocation8 + $0x30] sm:$0xf]
    %v227 = vld [vmem:[#allocation8 + $0x34] sm:$0xf]
    %v228 = vld [vmem:[#allocation8 + $0x38] sm:$0xf]
    %v229 = vld [vmem:[#allocation8 + $0x3c] sm:$0xf]
    %v230 = vld [vmem:[#allocation10] sm:$0x1]
    %v232 = vlaneseq
    %v233 = vshrl.u32 %v232, 7
    %v234 = vsub.s32 0, %v233
    %v235 = vrot.slane %v230, %v234
    %v253 = vunpack.c.l.b16 %v214
    %v254 = vunpack.c.l.b16 %v215
    %v255 = vunpack.c.l.b16 %v216
    %v256 = vunpack.c.l.b16 %v217
    %v257 = vunpack.c.l.b16 %v218
    %v258 = vunpack.c.l.b16 %v219
    %v259 = vunpack.c.l.b16 %v220
    %v260 = vunpack.c.l.b16 %v221
    %v261 = vunpack.c.l.b16 %v222
    %v262 = vunpack.c.l.b16 %v223
    %v263 = vunpack.c.l.b16 %v224
    %v264 = vunpack.c.l.b16 %v225
    %v265 = vunpack.c.l.b16 %v226
    %v266 = vunpack.c.l.b16 %v227
    %v267 = vunpack.c.l.b16 %v228
    %v268 = vunpack.c.l.b16 %v229
    %v269 = vpack.c.b16 %v254, %v253
    %v270 = vpack.c.b16 %v256, %v255
    %v271 = vpack.c.b16 %v258, %v257
    %v272 = vpack.c.b16 %v260, %v259
    %v273 = vpack.c.b16 %v262, %v261
    %v274 = vpack.c.b16 %v264, %v263
    %v275 = vpack.c.b16 %v266, %v265
    %v276 = vpack.c.b16 %v268, %v267
    %285 = vmatprep.subr.bf16.mxu0 0
    %286 = vmatpush1.bf16.msra.mxu0 %v269
    %287 = vmatprep.subr.bf16.mxu0 0
    %288 = vmatpush1.bf16.msra.mxu0 %v270
    %289 = vmatprep.subr.bf16.mxu0 0
    %290 = vmatpush1.bf16.msra.mxu0 %v271
    %291 = vmatprep.subr.bf16.mxu0 0
    %292 = vmatpush1.bf16.msra.mxu0 %v272
    %293 = vmatprep.subr.bf16.mxu0 0
    %294 = vmatpush1.bf16.msra.mxu0 %v273
    %295 = vmatprep.subr.bf16.mxu0 0
    %296 = vmatpush1.bf16.msra.mxu0 %v274
    %297 = vmatprep.subr.bf16.mxu0 0
    %298 = vmatpush1.bf16.msra.mxu0 %v275
    %299 = vmatprep.subr.bf16.mxu0 0
    %300 = vmatpush1.bf16.msra.mxu0 %v276
    %301 = vmatprep.subr.bf16.mxu0 0
    %302 = vmatpush1.bf16.msra.mxu0 0
    %303 = vmatprep.subr.bf16.mxu0 0
    %304 = vmatpush1.bf16.msra.mxu0 0
    %305 = vmatprep.subr.bf16.mxu0 0
    %306 = vmatpush1.bf16.msra.mxu0 0
    %307 = vmatprep.subr.bf16.mxu0 0
    %308 = vmatpush1.bf16.msra.mxu0 0
    %309 = vmatprep.subr.bf16.mxu0 0
    %310 = vmatpush1.bf16.msra.mxu0 0
    %311 = vmatprep.subr.bf16.mxu0 0
    %312 = vmatpush1.bf16.msra.mxu0 0
    %313 = vmatprep.subr.bf16.mxu0 0
    %314 = vmatpush1.bf16.msra.mxu0 0
    %315 = vmatprep.subr.bf16.mxu0 0
    %316 = vmatpush1.bf16.msra.mxu0 0
    %317 = vmatprep.mubr.bf16.mxu0 0
    %318 = vmatmul.mubr.bf16.gmra.mrb[0].mxu0 %v213
    %v319 = vpop.f32.mrb[0].mxu0
    %v320 = vadd.f32 %v235, %v319
    %v321 = vpop.f32.mrb[0].mxu0
    %v322 = vpop.f32.mrb[0].mxu0
    %v323 = vadd.f32 %v235, %v322
    %v324 = vpop.f32.mrb[0].mxu0
    %325 = vdwg.mxu0
    %v326 = vxor.u32 %v320, 2147483648
    %v327 = vxor.u32 %v323, 2147483648
    %v328 = vmul.f32 %v326, 1.442695
    %v329 = vpow.pop %v328
    %v330 = vmul.f32 %v327, 1.442695
    %v331 = vpow.pop %v330
    %v332 = vadd.f32 %v329, 1.0
    %v333 = vadd.f32 %v331, 1.0
    %v334 = vrcp.pop %v332
    %v335 = vmul.f32 1.0, %v334
    %v336 = vrcp.pop %v333
    %v337 = vmul.f32 1.0, %v336
    %338 = vst [vmem:[#allocation11] sm:$0xff] %v335
    %339 = vst [vmem:[#allocation11 + $0x8] sm:$0xff] %v337
    // Predicated region
    $region42: #{tpu_custom_call.1} parent=1 // pred_check
      _
    $region43: #{tpu_custom_call.1} parent=1 // pred_check_branch
      %341 = sbr.rel (0) target = $region45
    $region44: #{tpu_custom_call.1} parent=1 // pred_region
      %s343 = ssub.s32 256, 256
      %344 = vsyncadd [#allocation4], %s343
      %s345 = sshll.u32 [#allocation11], 4
      %s346 = int_to_ptr.vmem [resolvable:$true] %s345
      %351 = dma.vmem_to_hbm [thread:$0]  %s346, 256, %s5, [#allocation4], 128, 128, 8
    $region45: #{tpu_custom_call.1} parent=1 // pred_fallthru
      _
    // Predicated region
    $region46: #{tpu_custom_call.1} parent=1 // pred_check
      _
    $region47: #{tpu_custom_call.1} parent=1 // pred_check_branch
      %353 = sbr.rel (0) target = $region49
    $region48: #{tpu_custom_call.1} parent=1 // pred_region
      %354 = dma.done [#allocation4], 256
    $region49: #{tpu_custom_call.1} parent=1 // pred_fallthru
      _
    %355 = vsyncpa [#allocation3], 1
    %356 = vsyncpa [#allocation6], 1
    %357 = vsyncpa [#allocation9], 1
    %358 = vsyncpa [#allocation4], 1

</llo_original>
